<compile_context>
chip_gen: v5e
topology: v5e:2x2
jax: 0.10.0
libtpu: 0.0.40
codegen_flags: <defaults>
</compile_context>

<pallas_src>
import functools

import jax
import jax.numpy as jnp
from jax.experimental import pallas as pl
from jax.experimental.pallas import tpu as pltpu


def _round_up(x: int, m: int) -> int:
    return ((x + m - 1) // m) * m


_VOCAB_CHUNK = 512  # one-hot is built / matmul'd per chunk of this many rows


def _tpu_vmem_capacity_bytes() -> int:
    """Per-TensorCore VMEM capacity; conservative fallback if the query fails."""
    try:
        cap = getattr(pltpu.get_tpu_info(), "vmem_capacity_bytes", None)
        if cap:
            return int(cap)
    except Exception:
        pass
    return 64 << 20  # v7x per-TC (smallest of current generations)


def _chip_kind() -> str:
    try:
        return jax.devices()[0].device_kind.lower()
    except Exception:
        return ""


# -----------------------------------------------------------------------------
# Path 1: VMEM-resident table + vocab-chunked one-hot matmul on the MXU.
# -----------------------------------------------------------------------------
def _onehot_kernel(ids_ref, w_ref, o_ref, *, v_chunk):
    ids = ids_ref[...]                               # (T, 1) int32
    T = ids.shape[0]
    V, D = w_ref.shape                               # V is a multiple of v_chunk
    n_chunks = V // v_chunk

    def chunk_dot(base, w_chunk):
        vocab_iota = base + jax.lax.broadcasted_iota(jnp.int32, (T, v_chunk), 1)
        one_hot = (ids == vocab_iota).astype(w_chunk.dtype)   # exact 0/1 rows
        return jnp.dot(one_hot, w_chunk, preferred_element_type=jnp.float32)

    if n_chunks == 1:
        acc = chunk_dot(0, w_ref[...])
    else:
        def body(c, acc):
            base = pl.multiple_of(c * v_chunk, v_chunk)
            return acc + chunk_dot(base, w_ref[pl.ds(base, v_chunk), :])

        acc = jax.lax.fori_loop(0, n_chunks, body,
                                jnp.zeros((T, D), jnp.float32),
                                unroll=n_chunks <= 8)

    o_ref[...] = acc.astype(o_ref.dtype)


def _embedding_onehot(flat_ids, weight, token_tile, vmem_cap):
    n_tok = flat_ids.shape[0]
    V, D = weight.shape
    T = token_tile

    if V > _VOCAB_CHUNK:
        v_chunk = _VOCAB_CHUNK
        v_pad = _round_up(V, v_chunk)
        if v_pad != V:  # padded rows are never selected (ids are clamped < V)
            weight = jnp.zeros((v_pad, D), weight.dtype).at[:V].set(weight)
    else:
        v_chunk = V
        v_pad = V

    n_pad = _round_up(n_tok, T)
    ids_padded = jnp.zeros((n_pad, 1), jnp.int32).at[:n_tok, 0].set(flat_ids)
    n_tiles = n_pad // T

    itemsize = jnp.dtype(weight.dtype).itemsize
    # Explicit VMEM budget (v5e's default scoped limit is only 16 MiB):
    # single-buffered resident table + double-buffered id/output tiles + the
    # per-chunk one-hot and f32 accumulator temporaries, with headroom.
    budget = (v_pad * D * itemsize
              + 2 * T * D * itemsize
              + 2 * T * 4
              + T * v_chunk * itemsize
              + T * D * 4)
    vmem_limit = min(max(int(budget * 1.5) + (4 << 20), 32 << 20), vmem_cap)

    cost = pl.CostEstimate(
        flops=2 * n_pad * v_pad * D,
        transcendentals=0,
        bytes_accessed=v_pad * D * itemsize + n_pad * (4 + D * itemsize),
    )

    out = pl.pallas_call(
        functools.partial(_onehot_kernel, v_chunk=v_chunk),
        out_shape=jax.ShapeDtypeStruct((n_pad, D), weight.dtype),
        grid_spec=pltpu.PrefetchScalarGridSpec(
            num_scalar_prefetch=0,
            grid=(n_tiles,),
            in_specs=[
                pl.BlockSpec((T, 1), lambda i: (i, 0)),        # token-id tile
                # Constant index map -> fetched once; single buffer so the
                # table is not double-buffered in VMEM.
                pl.BlockSpec((v_pad, D), lambda i: (0, 0),
                             pipeline_mode=pl.Buffered(1)),
            ],
            out_specs=pl.BlockSpec((T, D), lambda i: (i, 0)),
        ),
        compiler_params=pltpu.CompilerParams(
            dimension_semantics=("parallel",),                 # megacore on v7x
            vmem_limit_bytes=vmem_limit,
        ),
        cost_estimate=cost,
    )(ids_padded, weight)
    return out[:n_tok]


# -----------------------------------------------------------------------------
# Path 2: HBM-resident table, per-row DMA gather directly into the output
# block, one batched wait per tile.
# -----------------------------------------------------------------------------
def _dma_gather_kernel(ids_ref, w_hbm, o_ref, sem, *, token_tile):
    T = token_tile
    base = pl.program_id(0) * T

    # Issue T row-gather DMAs from the HBM table straight into this tile's
    # output block (no staging buffer, no VMEM->VMEM copy).  All T copies are
    # outstanding simultaneously, hiding HBM latency within the tile.
    @pl.loop(0, T)
    def _(t):
        row = ids_ref[base + t]
        pltpu.make_async_copy(
            w_hbm.at[pl.ds(row, 1), :],
            o_ref.at[pl.ds(t, 1), :],
            sem,
        ).start()

    # One batched wait: DMA semaphores count bytes, so a single (T, D)-sized
    # descriptor consumes exactly the bytes signalled by the T row copies.
    pltpu.make_async_copy(w_hbm.at[pl.ds(0, T), :], o_ref, sem).wait()


def _embedding_dma(flat_ids, weight, token_tile, vmem_cap):
    n_tok = flat_ids.shape[0]
    V, D = weight.shape
    T = token_tile
    n_pad = _round_up(n_tok, T)
    # TODO(synk): chunk flat_ids for token counts in the hundreds of thousands
    # so the scalar-prefetch SMEM array (pads to next_pow2(4*n_pad) bytes)
    # stays within SMEM capacity.
    ids_padded = jnp.zeros((n_pad,), jnp.int32).at[:n_tok].set(flat_ids)
    n_tiles = n_pad // T

    itemsize = jnp.dtype(weight.dtype).itemsize
    budget = 2 * T * D * itemsize + 4 * n_pad
    vmem_limit = min(max(int(budget * 2), 32 << 20), vmem_cap)

    cost = pl.CostEstimate(
        flops=0,
        transcendentals=0,
        bytes_accessed=2 * n_pad * D * itemsize + n_pad * 4,
    )

    out = pl.pallas_call(
        functools.partial(_dma_gather_kernel, token_tile=T),
        out_shape=jax.ShapeDtypeStruct((n_pad, D), weight.dtype),
        grid_spec=pltpu.PrefetchScalarGridSpec(
            num_scalar_prefetch=1,                          # flat ids -> SMEM
            grid=(n_tiles,),
            in_specs=[pl.BlockSpec(memory_space=pl.ANY)],   # table stays in HBM
            out_specs=pl.BlockSpec((T, D), lambda i, ids: (i, 0)),
            scratch_shapes=[pltpu.SemaphoreType.DMA(())],   # single DMA sem
        ),
        compiler_params=pltpu.CompilerParams(
            # Tiles are independent (rows land directly in o_ref), so this
            # axis can shard across v7x's two TensorCores.
            dimension_semantics=("parallel",),
            vmem_limit_bytes=vmem_limit,
        ),
        cost_estimate=cost,
    )(ids_padded, weight)
    return out[:n_tok]


# -----------------------------------------------------------------------------
# Public wrapper.
# -----------------------------------------------------------------------------
def embedding_lookup(x, weight, *, force_path=None, token_tile=None):
    """Pallas equivalent of `weight[x]` (PyTorch Embedding.forward).

    NOTE: out-of-range ids are clamped into [0, vocab) (PyTorch raises).
    """
    V, D = weight.shape
    flat_ids = jnp.clip(x.reshape(-1).astype(jnp.int32), 0, V - 1)
    n_tok = flat_ids.shape[0]

    itemsize = jnp.dtype(weight.dtype).itemsize
    vmem_cap = _tpu_vmem_capacity_bytes()
    is_v5 = "v5" in _chip_kind()

    # Generation-aware routing: the resident (one-hot) path is bounded by VMEM
    # per TensorCore and by one-hot FLOPs (which scale with V, and are ~3-6x
    # more expensive for f32 tables since the MXU emulates f32 matmul).
    resident_table_cap = min(24 << 20, vmem_cap // 6)
    if weight.dtype == jnp.float32:
        max_vocab = 2048
    else:
        max_vocab = 4096 if is_v5 else 8192

    use_onehot = (V * D * itemsize <= resident_table_cap and V <= max_vocab)
    if force_path is not None:
        use_onehot = (force_path == "onehot")
    if V < 8:
        use_onehot = True                     # too small for the row-DMA path

    # Token tile: big enough to amortize per-grid-step overhead, small enough
    # that the double-buffered (T, D) output block leaves VMEM headroom.
    # v5e's MXU is 128 wide (one-hot path), v6e/v7x's is 256.
    if token_tile is None:
        T = (128 if is_v5 else 256) if use_onehot else 256
    else:
        T = int(token_tile)
    max_rows = max(8, (vmem_cap // 4) // max(1, 2 * D * itemsize))
    T = min(T, max_rows, _round_up(n_tok, 8))
    if not use_onehot:
        T = min(T, (V // 8) * 8)   # batched-wait src slice (T rows) must fit V
    T = max(8, (T // 8) * 8)

    if use_onehot:
        out_flat = _embedding_onehot(flat_ids, weight, T, vmem_cap)
    else:
        out_flat = _embedding_dma(flat_ids, weight, T, vmem_cap)

    return out_flat.reshape(x.shape + (D,))


if __name__ == "__main__":
    vocab_size = 64
    d_model = 128   # lane-aligned last dim
    B, S = 2, 8

    key = jax.random.PRNGKey(0)
    k_w, k_x = jax.random.split(key)

    # Deterministic parameter init matching torch.randn(vocab_size, d_model).
    weight = jax.random.normal(k_w, (vocab_size, d_model), dtype=jnp.float32)
    x = jax.random.randint(k_x, (B, S), minval=0, maxval=vocab_size,
                           dtype=jnp.int32)

    ref = jnp.take(weight, x, axis=0)

    # Auto-selected path (small f32 table -> VMEM-resident one-hot matmul).
    # Tolerance covers the MXU's multi-pass f32 matmul mode; a wrong-row gather
    # would still be caught (errors would be O(1), not O(1e-3)).
    out = jax.block_until_ready(embedding_lookup(x, weight))
    assert out.shape == (B, S, d_model)
    assert jnp.allclose(out, ref, rtol=2e-2, atol=2e-2), \
        "one-hot path mismatch vs reference gather"

    # Large-table path, forced at small shapes; token_tile=8 -> 2 grid steps so
    # the per-tile row-DMA + single batched-wait logic is exercised.  Pure byte
    # copy, so it must match exactly.
    out_dma = jax.block_until_ready(
        embedding_lookup(x, weight, force_path="dma", token_tile=8))
    assert jnp.array_equal(out_dma, ref), "DMA path mismatch vs reference gather"

    print("KERNEL_OK")
</pallas_src>

<mosaic_0001>
module attributes {stable_mosaic.version = 11 : i64} {
  func.func @_onehot_kernel(%arg0: i32, %arg1: memref<16x1xi32, #tpu.memory_space<vmem>>, %arg2: memref<64x128xf32, #tpu.memory_space<vmem>>, %arg3: memref<16x128xf32, #tpu.memory_space<vmem>>) attributes {dimension_semantics = [#tpu.dimension_semantics<parallel>], iteration_bounds = array<i64: 1>, scalar_prefetch = 0 : i64, scratch_operands = 0 : i64, tpu.core_type = #tpu.core_type<tc>, window_params = [{transform_indices = @transform_0, window_bounds = array<i64: 16, 1>}, {pipeline_mode = #tpu.pipeline_mode<synchronous>, transform_indices = @transform_1, window_bounds = array<i64: 64, 128>}, {transform_indices = @transform_2, window_bounds = array<i64: 16, 128>}]} {
    %c0 = arith.constant 0 : index
    %c0_0 = arith.constant 0 : index
    %0 = vector.load %arg1[%c0, %c0_0] : memref<16x1xi32, #tpu.memory_space<vmem>>, vector<16x1xi32>
    %c0_1 = arith.constant 0 : index
    %c0_2 = arith.constant 0 : index
    %1 = vector.load %arg2[%c0_1, %c0_2] : memref<64x128xf32, #tpu.memory_space<vmem>>, vector<64x128xf32>
    %2 = tpu.iota {dimensions = array<i32: 1>} : vector<16x64xi32>
    %c0_i32 = arith.constant 0 : i32
    %3 = vector.broadcast %c0_i32 : i32 to vector<16x64xi32>
    %4 = arith.addi %3, %2 : vector<16x64xi32>
    %5 = vector.broadcast %0 : vector<16x1xi32> to vector<16x64xi32>
    %6 = arith.cmpi eq, %5, %4 : vector<16x64xi32>
    %7 = arith.extui %6 : vector<16x64xi1> to vector<16x64xi32>
    %8 = arith.sitofp %7 : vector<16x64xi32> to vector<16x64xf32>
    %cst = arith.constant dense<0.000000e+00> : vector<16x128xf32>
    %9 = tpu.matmul %8, %1, %cst {dimension_numbers = #tpu.dot_dimension_numbers<[1], [0], [0], [1], [0, 0, 1, 1], [], []>} : vector<16x64xf32>, vector<64x128xf32>, vector<16x128xf32> -> vector<16x128xf32>
    %c0_3 = arith.constant 0 : index
    %c0_4 = arith.constant 0 : index
    %10 = vector.load %arg3[%c0_3, %c0_4] : memref<16x128xf32, #tpu.memory_space<vmem>>, vector<16x128xf32>
    tpu.vector_store %arg3[%c0_3, %c0_4], %9 {strides = array<i32>} : memref<16x128xf32, #tpu.memory_space<vmem>>, vector<16x128xf32>,
    return
  }
  func.func @transform_0(%arg0: i32) -> (i32, i32) {
    %c0_i32 = arith.constant 0 : i32
    %c0_i32_0 = arith.constant 0 : i32
    return %arg0, %c0_i32 : i32, i32
  }
  func.func @transform_1(%arg0: i32) -> (i32, i32) {
    %c0_i32 = arith.constant 0 : i32
    %c0_i32_0 = arith.constant 0 : i32
    %c0_i32_1 = arith.constant 0 : i32
    return %c0_i32, %c0_i32_0 : i32, i32
  }
  func.func @transform_2(%arg0: i32) -> (i32, i32) {
    %c0_i32 = arith.constant 0 : i32
    %c0_i32_0 = arith.constant 0 : i32
    return %arg0, %c0_i32 : i32, i32
  }
}

</mosaic_0001>

<llo_original>
// kernel: tpu_custom_call.1
$region0: #{tpu_custom_call.1}
  #allocation0 [shape = 'u32[]', space=smem, size = 0x4, offset = 0x4, fixed_abs, tag = 'smem constant byte address 0x4 - core index']
  #allocation1 [shape = 'u32[72,128]{1,0:T(1,128)}', space=vmem, size = 0x9000, scoped, tag = 'internal scratch']
  %s0 = inlined_call_operand.vmem [shape: s32[16,1], index: 0, kind: input, shape index: {}]
  %s1 = inlined_call_operand.hbm [shape: f32[64,128], index: 1, kind: input, shape index: {}]
  %s2 = inlined_call_operand.hbm [shape: f32[16,128], index: 2, kind: output, shape index: {}]
  %s3 = sld [smem:[#allocation0]]
  $region22: #{tpu_custom_call.1} parent=0
    _
  %s5 = ssub.s32 1, %s3
  %s6 = scalar_select 0, %s5, %s3
  $region1: #{tpu_custom_call.1} parent=0
    #allocation2 [shape = 'u8[32768]{0}', space=vmem, size = 0x8000, scoped, tag = 'input window, operand 1, single buffered']
    #allocation3 [shape = 's32[1]{0}', space=sflag, size = 0x4, scoped, tag = 'scoped memory for tpu_custom_call.1']
    #allocation4 [shape = 's32[1]{0}', space=sflag, size = 0x4, scoped, tag = 'scoped memory for tpu_custom_call.1']
    #allocation5 [shape = 'u8[8192]{0}', space=vmem, size = 0x2000, scoped, tag = 'output window, operand 0, single buffered']
    %7 = vsyncpa [#allocation3], 0
    %8 = vsyncpa [#allocation4], 0
    // Predicated region
    $region2: #{tpu_custom_call.1} parent=1 // pred_check
      _
    $region3: #{tpu_custom_call.1} parent=1 // pred_check_branch
      %10 = sbr.rel (0) target = $region5
    $region4: #{tpu_custom_call.1} parent=1 // pred_region
      _
    $region5: #{tpu_custom_call.1} parent=1 // pred_fallthru
      _
    // Predicated region
    $region6: #{tpu_custom_call.1} parent=1 // pred_check
      _
    $region7: #{tpu_custom_call.1} parent=1 // pred_check_branch
      %12 = sbr.rel (0) target = $region9
    $region8: #{tpu_custom_call.1} parent=1 // pred_region
      %14 = vsyncadd [#allocation3], 0
      %s15 = sshll.u32 %s1, 4
      %s16 = int_to_ptr.hbm [resolvable:$true] %s15
      %s17 = sshll.u32 [#allocation2], 4
      %s18 = int_to_ptr.vmem [resolvable:$true] %s17
      %23 = dma.hbm_to_vmem [thread:$0]  %s16, 1024, %s18, [#allocation3], 128, 128, 8
    $region9: #{tpu_custom_call.1} parent=1 // pred_fallthru
      _
    // Predicated region
    $region10: #{tpu_custom_call.1} parent=1 // pred_check
      _
    $region11: #{tpu_custom_call.1} parent=1 // pred_check_branch
      %25 = sbr.rel (0) target = $region13
    $region12: #{tpu_custom_call.1} parent=1 // pred_region
      %27 = dma.done [#allocation3], 1024
    $region13: #{tpu_custom_call.1} parent=1 // pred_fallthru
      _
    %v28 = vld [vmem:[%s0] sm:$0xff]
    %v29 = vld [vmem:[%s0 + $0x8] sm:$0xff]
    %v30 = vld [vmem:[#allocation2] sm:$0xff]
    %v31 = vld [vmem:[#allocation2 + $0x8] sm:$0xff]
    %v32 = vld [vmem:[#allocation2 + $0x10] sm:$0xff]
    %v33 = vld [vmem:[#allocation2 + $0x18] sm:$0xff]
    %v34 = vld [vmem:[#allocation2 + $0x20] sm:$0xff]
    %v35 = vld [vmem:[#allocation2 + $0x28] sm:$0xff]
    %v36 = vld [vmem:[#allocation2 + $0x30] sm:$0xff]
    %v37 = vld [vmem:[#allocation2 + $0x38] sm:$0xff]
    %v38 = vlaneseq
    %v39 = vand.u32 %v38, 127
    %40 = vset.pattern.permute.xlu0 0
    %41 = vperm.xlu0 %40, %v28
    %v42 = vpop.permute.xlu0 %41
    %43 = vset.pattern.permute.xlu0 0
    %44 = vperm.xlu0 %43, %v29
    %v45 = vpop.permute.xlu0 %44
    %vm46 = vcmp.eq.s32.totalorder %v42, %v39
    %vm47 = vcmp.eq.s32.totalorder %v45, %v39
    %v48 = vsel %vm46, 1, 0
    %v49 = vsel %vm47, 1, 0
    %v50 = vcvt.s32.f32 %v48
    %v51 = vcvt.s32.f32 %v49
    %vm52 = vcmask 523264
    %v54 = vsel %vm52, %v50, 0
    %v57 = vsel %vm52, %v51, 0
    %59 = vmatpush.msra.mxu0 0.0
    %60 = vmatpush.msra.mxu0 0.0
    %61 = vmatpush.msra.mxu0 0.0
    %62 = vmatpush.msra.mxu0 0.0
    %63 = vmatpush.msra.mxu0 0.0
    %64 = vmatpush.msra.mxu0 0.0
    %65 = vmatpush.msra.mxu0 0.0
    %66 = vmatpush.msra.mxu0 0.0
    %67 = vmatpush.msra.mxu0 %v37
    %68 = vmatpush.msra.mxu0 %v36
    %69 = vmatpush.msra.mxu0 %v35
    %70 = vmatpush.msra.mxu0 %v34
    %71 = vmatpush.msra.mxu0 %v33
    %72 = vmatpush.msra.mxu0 %v32
    %73 = vmatpush.msra.mxu0 %v31
    %74 = vmatpush.msra.mxu0 %v30
    %75 = vmatmul.f32.gmra.mxu0 %v54
    %v76 = vpop.f32.mrf.mxu0
    %v77 = vadd.f32 0.0, %v76
    %78 = vmatmul.f32.gmra.mxu0 %v57
    %v79 = vpop.f32.mrf.mxu0
    %v80 = vadd.f32 0.0, %v79
    %81 = vdwg.mxu0
    %82 = vst [vmem:[#allocation5] sm:$0xff] %v77
    %83 = vst [vmem:[#allocation5 + $0x8] sm:$0xff] %v80
    // Predicated region
    $region14: #{tpu_custom_call.1} parent=1 // pred_check
      _
    $region15: #{tpu_custom_call.1} parent=1 // pred_check_branch
      %85 = sbr.rel (0) target = $region17
    $region16: #{tpu_custom_call.1} parent=1 // pred_region
      %87 = vsyncadd [#allocation4], 0
      %s88 = sshll.u32 [#allocation5], 4
      %s89 = int_to_ptr.vmem [resolvable:$true] %s88
      %s90 = sshll.u32 %s2, 4
      %s91 = int_to_ptr.hbm [resolvable:$true] %s90
      %96 = dma.vmem_to_hbm [thread:$0]  %s89, 256, %s91, [#allocation4], 128, 128, 8
    $region17: #{tpu_custom_call.1} parent=1 // pred_fallthru
      _
    // Predicated region
    $region18: #{tpu_custom_call.1} parent=1 // pred_check
      _
    $region19: #{tpu_custom_call.1} parent=1 // pred_check_branch
      %98 = sbr.rel (0) target = $region21
    $region20: #{tpu_custom_call.1} parent=1 // pred_region
      %100 = dma.done [#allocation4], 256
    $region21: #{tpu_custom_call.1} parent=1 // pred_fallthru
      _
    %101 = vsyncpa [#allocation3], 1
    %102 = vsyncpa [#allocation4], 1

</llo_original>
